<compile_context>
chip_gen: v5e
topology: v5e:2x2
jax: 0.10.0
libtpu: 0.0.40
codegen_flags: <defaults>
</compile_context>

<pallas_src>
from functools import partial

import jax
import jax.numpy as jnp
from jax.experimental import pallas as pl
from jax.experimental.pallas import tpu as pltpu


# ----------------------------------------------------------------------------
# Fused Pallas kernels
# ----------------------------------------------------------------------------
def _zccbam_fused_kernel(x_ref, w1_ref, b1_ref, w2_ref, b2_ref,
                         wf_ref, tf_ref, bw2_ref, t2_ref,
                         feat_ref, out_ref):
    # x:   (bn, B*5)   bf16     w1: (B*5,  B*H) bf16 block-diag  b1: (1, B*H) f32
    # w2:  (B*H, B*C)  bf16     b2: (1, B*C) f32
    # wf:  (B*H, Hbs)  bf16 (= w2_bd @ bw1, BN1 scale folded)    tf: (1, Hbs) f32
    # bw2: (Hbs, C)    bf16 (BN2 scale folded)                   t2: (1, C)   f32
    x = x_ref[...]                                               # already bf16

    # --- up_dimension: per-bin Linear(5,H)+ReLU ---
    h = jnp.dot(x, w1_ref[...], preferred_element_type=jnp.float32)
    h = jnp.maximum(h + b1_ref[...], 0.0).astype(jnp.bfloat16)   # (bn, B*H)

    # --- feat path: per-bin Linear(H,C), kept only to emit mlp_feat ---
    y = jnp.dot(h, w2_ref[...], preferred_element_type=jnp.float32) + b2_ref[...]
    feat_ref[...] = y.astype(feat_ref.dtype)                     # bf16 store

    # --- bin_shuffle path: (up_dim Linear2 @ bin_shuffle Linear1) pre-folded ---
    z = jnp.dot(h, wf_ref[...], preferred_element_type=jnp.float32)
    z = jnp.maximum(z + tf_ref[...], 0.0).astype(jnp.bfloat16)   # (bn, Hbs)
    o = jnp.dot(z, bw2_ref[...], preferred_element_type=jnp.float32)
    out_ref[...] = jnp.maximum(o + t2_ref[...], 0.0).astype(out_ref.dtype)


def _zccbam_fused_kernel_nofeat(x_ref, w1_ref, b1_ref,
                                wf_ref, tf_ref, bw2_ref, t2_ref, out_ref):
    x = x_ref[...]
    h = jnp.dot(x, w1_ref[...], preferred_element_type=jnp.float32)
    h = jnp.maximum(h + b1_ref[...], 0.0).astype(jnp.bfloat16)
    z = jnp.dot(h, wf_ref[...], preferred_element_type=jnp.float32)
    z = jnp.maximum(z + tf_ref[...], 0.0).astype(jnp.bfloat16)
    o = jnp.dot(z, bw2_ref[...], preferred_element_type=jnp.float32)
    out_ref[...] = jnp.maximum(o + t2_ref[...], 0.0).astype(out_ref.dtype)


# ----------------------------------------------------------------------------
# Per-generation tiling selection
# ----------------------------------------------------------------------------
def _round_up(x, m):
    return ((x + m - 1) // m) * m


def _tiling_for_device(n_rows):
    """Pick (row-tile, vmem limit) from the device's VMEM capacity.

    v5e / v6e : 128 MiB physical VMEM, 1 TensorCore  -> big tiles (bn<=4096).
    v7x-like  :  64 MiB physical VMEM, 2 TensorCores -> bn<=2048 and make sure
                 the "parallel" row grid has >= 2 balanced steps.
    Unknown   : conservative defaults that are safe everywhere.
    """
    bn_cap, vmem_limit, two_cores = 2048, 48 * 1024 * 1024, False
    try:
        info = pltpu.get_tpu_info()
        vmem_bytes = getattr(info, "vmem_capacity_bytes", None) or 0
        if vmem_bytes >= 100 * 1024 * 1024:          # v5e / v6e
            bn_cap, vmem_limit, two_cores = 4096, 64 * 1024 * 1024, False
        elif vmem_bytes > 0:                         # v7x-like (64 MiB, 2 TCs)
            bn_cap, vmem_limit, two_cores = 2048, 48 * 1024 * 1024, True
    except Exception:
        pass

    if two_cores:
        # >= 2 (balanced) grid steps so both TensorCores get work.
        bn = min(bn_cap, max(8, _round_up(pl.cdiv(n_rows, 2), 256)))
    else:
        bn = min(bn_cap, max(8, _round_up(n_rows, 8)))
    return bn, vmem_limit


# ----------------------------------------------------------------------------
# Fused pallas_call wrapper
# ----------------------------------------------------------------------------
def zccbam_fused_pallas(feats_flat_bf16, fp, *, emit_feat=True, bn=None):
    """feats_flat_bf16: (N, B*5) bf16 ->
         emit_feat=True : (mlp_feat_flat (N, B*C) bf16, out (N, C) f32)
         emit_feat=False:  out (N, C) f32
    """
    N, d_in = feats_flat_bf16.shape
    BH = fp["w1_bd"].shape[1]
    BC = fp["w2_bd"].shape[1]
    Hbs = fp["wfold"].shape[1]
    C = fp["bw2"].shape[1]

    if N == 0:  # static (shape-level) guard; fine under jit
        out0 = jnp.zeros((0, C), jnp.float32)
        return (jnp.zeros((0, BC), jnp.bfloat16), out0) if emit_feat else out0

    if bn is None:
        bn, vmem_limit = _tiling_for_device(N)
    else:
        bn = max(8, _round_up(min(bn, max(N, 8)), 8))
        _, vmem_limit = _tiling_for_device(N)
    grid = (pl.cdiv(N, bn),)     # no padded copy: Pallas masks the tail block

    const = lambda i: (0, 0)
    wspec = lambda name: pl.BlockSpec(fp[name].shape, const)
    # NOTE: pl.Buffered(1) on these constant specs would save a duplicate VMEM
    # buffer (~150 KB total) — omitted for portability (minor).

    weight_keys = (("w1_bd", "b1_t", "w2_bd", "b2_t", "wfold", "tfold", "bw2", "t2")
                   if emit_feat else
                   ("w1_bd", "b1_t", "wfold", "tfold", "bw2", "t2"))
    w_bytes = sum(int(fp[k].size) * fp[k].dtype.itemsize for k in weight_keys)

    if emit_feat:
        flops = 2 * N * (d_in * BH + BH * BC + BH * Hbs + Hbs * C)
        bytes_accessed = N * (d_in * 2 + BC * 2 + C * 4) + w_bytes
    else:
        flops = 2 * N * (d_in * BH + BH * Hbs + Hbs * C)
        bytes_accessed = N * (d_in * 2 + C * 4) + w_bytes
    cost = pl.CostEstimate(flops=flops, transcendentals=0,
                           bytes_accessed=bytes_accessed)

    cparams = pltpu.CompilerParams(
        dimension_semantics=("parallel",),      # megacore / v7x 2-TC split
        vmem_limit_bytes=vmem_limit)

    row_spec_in = pl.BlockSpec((bn, d_in), lambda i: (i, 0))

    if emit_feat:
        feat, out = pl.pallas_call(
            _zccbam_fused_kernel,
            out_shape=(jax.ShapeDtypeStruct((N, BC), jnp.bfloat16),   # bf16 feat
                       jax.ShapeDtypeStruct((N, C), jnp.float32)),
            grid=grid,
            in_specs=[row_spec_in,
                      wspec("w1_bd"), wspec("b1_t"),
                      wspec("w2_bd"), wspec("b2_t"),
                      wspec("wfold"), wspec("tfold"),
                      wspec("bw2"), wspec("t2")],
            # `out` kept 32-wide on purpose: lane-padding it to 128 would 4x
            # its HBM write on an HBM-bound kernel.
            out_specs=(pl.BlockSpec((bn, BC), lambda i: (i, 0)),
                       pl.BlockSpec((bn, C), lambda i: (i, 0))),
            compiler_params=cparams,
            cost_estimate=cost,
        )(feats_flat_bf16, fp["w1_bd"], fp["b1_t"], fp["w2_bd"], fp["b2_t"],
          fp["wfold"], fp["tfold"], fp["bw2"], fp["t2"])
        return feat, out

    out = pl.pallas_call(
        _zccbam_fused_kernel_nofeat,
        out_shape=jax.ShapeDtypeStruct((N, C), jnp.float32),
        grid=grid,
        in_specs=[row_spec_in,
                  wspec("w1_bd"), wspec("b1_t"),
                  wspec("wfold"), wspec("tfold"),
                  wspec("bw2"), wspec("t2")],
        out_specs=pl.BlockSpec((bn, C), lambda i: (i, 0)),
        compiler_params=cparams,
        cost_estimate=cost,
    )(feats_flat_bf16, fp["w1_bd"], fp["b1_t"],
      fp["wfold"], fp["tfold"], fp["bw2"], fp["t2"])
    return out


# ----------------------------------------------------------------------------
# Parameters (PyTorch layout -> fused / TPU-friendly packing)
# ----------------------------------------------------------------------------
def fold_bn(gamma, beta, running_mean, running_var, eps=1e-3):
    # Reference bin_shuffle uses BatchNorm1d(eps=0.001); inference-mode fold.
    scale = gamma / jnp.sqrt(running_var + eps)
    shift = beta - running_mean * scale
    return scale, shift


def block_diag(w, B):
    """(d_in, d_out) -> (B*d_in, B*d_out) block-diagonal (one copy per bin)."""
    d_in, d_out = w.shape
    eye = jnp.eye(B, dtype=w.dtype)
    return jnp.einsum("bc,ij->bicj", eye, w).reshape(B * d_in, B * d_out)


def make_params(key, in_channels, out_channels, num_bins,
                compute_dtype=jnp.bfloat16):
    assert in_channels == out_channels, "module's view(N, P*C) requires C_in == C_out"
    C = out_channels
    B = num_bins
    H_up = C // 2
    d_bs_in = in_channels * B
    H_bs = d_bs_in // 2
    ks = jax.random.split(key, 4)

    # --- raw (PyTorch-equivalent, (in, out) layout) parameters ---------------
    up_w1 = 0.1 * jax.random.normal(ks[0], (5, H_up), jnp.float32)
    up_b1 = 0.01 * jnp.arange(H_up, dtype=jnp.float32)
    up_w2 = 0.1 * jax.random.normal(ks[1], (H_up, C), jnp.float32)
    up_b2 = 0.01 * jnp.arange(C, dtype=jnp.float32)
    bs_w1 = 0.05 * jax.random.normal(ks[2], (d_bs_in, H_bs), jnp.float32)
    bs_w2 = 0.05 * jax.random.normal(ks[3], (H_bs, C), jnp.float32)
    g1 = 1.0 + 0.01 * jnp.arange(H_bs, dtype=jnp.float32)
    be1 = 0.02 * jnp.arange(H_bs, dtype=jnp.float32)
    g2 = 1.0 + 0.01 * jnp.arange(C, dtype=jnp.float32)
    be2 = 0.02 * jnp.arange(C, dtype=jnp.float32)
    s1, t1 = fold_bn(g1, be1, jnp.zeros(H_bs), jnp.ones(H_bs))
    s2, t2 = fold_bn(g2, be2, jnp.zeros(C), jnp.ones(C))

    # --- fused packing (all folds done in f32, cast to bf16 once) ------------
    # Per-bin up_dimension as block-diagonal matmuls on the flat (N, B*5) layout.
    w1_bd_f32 = block_diag(up_w1, B)                     # (B*5,  B*H_up)
    w2_bd_f32 = block_diag(up_w2, B)                     # (B*H_up, B*C)
    b1_t = jnp.tile(up_b1, B)[None, :]                   # (1, B*H_up) f32
    b2_t = jnp.tile(up_b2, B)[None, :]                   # (1, B*C)    f32

    # Fold the permute(0,2,1).view(N, C*B) into bs_w1's rows (ZBAM == identity):
    #   flat_torch[n, c*B + b] == y[n, b, c] == flat_natural[n, b*C + c]
    r = jnp.arange(B * C)
    perm = (r % C) * B + (r // C)
    bw1_f32 = bs_w1[perm, :] * s1[None, :]               # BN1 scale folded

    # Exact fold: no nonlinearity between up_dimension's 2nd Linear and
    # bin_shuffle's 1st Linear  ->  z = relu(h @ (w2_bd@bw1) + (b2@bw1 + t1)).
    wfold_f32 = w2_bd_f32 @ bw1_f32                      # (B*H_up, H_bs)
    tfold = b2_t @ bw1_f32 + t1[None, :]                 # (1, H_bs)   f32

    bw2_f32 = bs_w2 * s2[None, :]                        # BN2 scale folded

    fused = dict(
        w1_bd=w1_bd_f32.astype(compute_dtype), b1_t=b1_t,
        w2_bd=w2_bd_f32.astype(compute_dtype), b2_t=b2_t,
        wfold=wfold_f32.astype(compute_dtype), tfold=tfold,
        bw2=bw2_f32.astype(compute_dtype), t2=t2[None, :],
    )
    return {"fused": fused}


# ----------------------------------------------------------------------------
# ZcCBAM forward
# ----------------------------------------------------------------------------
@partial(jax.jit, static_argnames=("num_bins", "out_channels"))
def _zccbam_forward_padded(params, voxels, voxel_coords, unq_inv, unq_cnt,
                           *, num_bins, out_channels):
    """Shapes depend only on P (pillar count); fully jit-able, no N recompiles."""
    B = num_bins
    P = unq_cnt.shape[0]

    # ---- binning (plain JAX scatter glue, same statement order as torch) ----
    # TODO(synk): scatter/gather glue stays in XLA; a Pallas scatter would not
    #             beat XLA here and would complicate the data-dependent indices.
    src = jnp.zeros((P, B, voxels.shape[1] + 1), dtype=voxels.dtype)
    src = src.at[unq_inv, voxel_coords[:, 1], 1:].set(voxels)
    src = src.at[:, :, 0].set(-1.0)
    src = src.at[unq_inv, voxel_coords[:, 1], 0].set(
        voxel_coords[:, 0].astype(jnp.float32))
    occupied_mask = unq_cnt >= 2

    mlp_bxyz = src[:, :, :4]                               # (P, B, 4) f32
    feats = src[:, :, 1:]                                  # (P, B, 5) f32
    # Pre-cast to bf16 here: fuses into the scatter producer, halves kernel input DMA.
    feats_flat = feats.astype(jnp.bfloat16).reshape(P, B * 5)

    y_flat, out = zccbam_fused_pallas(feats_flat, params["fused"], emit_feat=True)
    mlp_feat = y_flat.reshape(P, B, out_channels)          # bf16, free reshape
    return out, occupied_mask, mlp_bxyz, mlp_feat


def zccbam_forward(params, data_dict, *, num_bins, out_channels):
    out_full, occ, bxyz_full, feat_full = _zccbam_forward_padded(
        params,
        data_dict["voxel_features"],
        data_dict["voxel_features_coords"].astype(jnp.int32),
        data_dict["v_feat_unq_inv"],
        data_dict["v_feat_unq_cnt"],
        num_bins=num_bins, out_channels=out_channels)
    # Data-dependent compaction happens OUTSIDE the jitted graph, so the Pallas
    # kernel shape (and compile) never depends on the occupied count N.
    # residual (z_residual) defaults to False in the module config used here.
    return out_full[occ], occ, bxyz_full[occ], feat_full[occ]


# ----------------------------------------------------------------------------
# Example / smoke test
# ----------------------------------------------------------------------------
if __name__ == "__main__":
    # model_cfg: input_channel = output_channel = 32, num_bins = 8
    IN_C = OUT_C = 32
    NUM_BINS = 8
    NUM_VOXELS = 40
    NUM_PILLARS = 12
    BATCH = 2

    key = jax.random.PRNGKey(0)
    kp, k1, k2, k3, k4 = jax.random.split(key, 5)

    params = make_params(kp, IN_C, OUT_C, NUM_BINS)

    voxels = jax.random.normal(k1, (NUM_VOXELS, 5), jnp.float32)
    unq_inv = jax.random.randint(k2, (NUM_VOXELS,), 0, NUM_PILLARS)
    bin_idx = jax.random.randint(k3, (NUM_VOXELS,), 0, NUM_BINS)
    batch_idx = jax.random.randint(k4, (NUM_VOXELS,), 0, BATCH)
    voxel_coords = jnp.stack([batch_idx, bin_idx], axis=1)      # [:,0]=b, [:,1]=z-bin
    unq_cnt = jnp.bincount(unq_inv, length=NUM_PILLARS)
    unq_coords = jnp.arange(NUM_PILLARS)

    data_dict = {
        "voxel_features": voxels,
        "voxel_features_coords": voxel_coords,
        "v_feat_unq_coords": unq_coords,
        "v_feat_unq_inv": unq_inv,
        "v_feat_unq_cnt": unq_cnt,
    }

    out, occupied_mask, mlp_bxyz, mlp_feat = zccbam_forward(
        params, data_dict, num_bins=NUM_BINS, out_channels=OUT_C)
    jax.block_until_ready(out)

    N_kept = int(occupied_mask.sum())
    assert out.shape == (N_kept, OUT_C) and out.dtype == jnp.float32
    assert mlp_bxyz.shape == (N_kept, NUM_BINS, 4)
    assert mlp_feat.shape == (N_kept, NUM_BINS, OUT_C)
    assert bool(jnp.all(jnp.isfinite(out)))
    assert bool(jnp.all(jnp.isfinite(mlp_feat.astype(jnp.float32))))

    # also exercise the feat-less fast path once
    feats_bf16 = jax.random.normal(k1, (16, NUM_BINS * 5), jnp.float32).astype(jnp.bfloat16)
    out_only = zccbam_fused_pallas(feats_bf16, params["fused"], emit_feat=False)
    jax.block_until_ready(out_only)
    assert out_only.shape == (16, OUT_C)

    print("KERNEL_OK")
</pallas_src>

<mosaic_0001>
module attributes {stable_mosaic.version = 11 : i64} {
  func.func @_zccbam_fused_kernel(%arg0: i32, %arg1: memref<16x40xbf16, #tpu.memory_space<vmem>>, %arg2: memref<40x128xbf16, #tpu.memory_space<vmem>>, %arg3: memref<1x128xf32, #tpu.memory_space<vmem>>, %arg4: memref<128x256xbf16, #tpu.memory_space<vmem>>, %arg5: memref<1x256xf32, #tpu.memory_space<vmem>>, %arg6: memref<128x128xbf16, #tpu.memory_space<vmem>>, %arg7: memref<1x128xf32, #tpu.memory_space<vmem>>, %arg8: memref<128x32xbf16, #tpu.memory_space<vmem>>, %arg9: memref<1x32xf32, #tpu.memory_space<vmem>>, %arg10: memref<16x256xbf16, #tpu.memory_space<vmem>>, %arg11: memref<16x32xf32, #tpu.memory_space<vmem>>) attributes {dimension_semantics = [#tpu.dimension_semantics<parallel>], iteration_bounds = array<i64: 1>, scalar_prefetch = 0 : i64, scratch_operands = 0 : i64, tpu.core_type = #tpu.core_type<tc>, window_params = [{transform_indices = @transform_0, window_bounds = array<i64: 16, 40>}, {pipeline_mode = #tpu.pipeline_mode<synchronous>, transform_indices = @transform_1, window_bounds = array<i64: 40, 128>}, {pipeline_mode = #tpu.pipeline_mode<synchronous>, transform_indices = @transform_2, window_bounds = array<i64: 1, 128>}, {pipeline_mode = #tpu.pipeline_mode<synchronous>, transform_indices = @transform_3, window_bounds = array<i64: 128, 256>}, {pipeline_mode = #tpu.pipeline_mode<synchronous>, transform_indices = @transform_4, window_bounds = array<i64: 1, 256>}, {pipeline_mode = #tpu.pipeline_mode<synchronous>, transform_indices = @transform_5, window_bounds = array<i64: 128, 128>}, {pipeline_mode = #tpu.pipeline_mode<synchronous>, transform_indices = @transform_6, window_bounds = array<i64: 1, 128>}, {pipeline_mode = #tpu.pipeline_mode<synchronous>, transform_indices = @transform_7, window_bounds = array<i64: 128, 32>}, {pipeline_mode = #tpu.pipeline_mode<synchronous>, transform_indices = @transform_8, window_bounds = array<i64: 1, 32>}, {transform_indices = @transform_9, window_bounds = array<i64: 16, 256>}, {transform_indices = @transform_10, window_bounds = array<i64: 16, 32>}]} {
    %c0 = arith.constant 0 : index
    %c0_0 = arith.constant 0 : index
    %0 = vector.load %arg1[%c0, %c0_0] : memref<16x40xbf16, #tpu.memory_space<vmem>>, vector<16x40xbf16>
    %c0_1 = arith.constant 0 : index
    %c0_2 = arith.constant 0 : index
    %1 = vector.load %arg2[%c0_1, %c0_2] : memref<40x128xbf16, #tpu.memory_space<vmem>>, vector<40x128xbf16>
    %cst = arith.constant dense<0.000000e+00> : vector<16x128xf32>
    %2 = tpu.matmul %0, %1, %cst {dimension_numbers = #tpu.dot_dimension_numbers<[1], [0], [0], [1], [0, 0, 1, 1], [], []>} : vector<16x40xbf16>, vector<40x128xbf16>, vector<16x128xf32> -> vector<16x128xf32>
    %c0_3 = arith.constant 0 : index
    %c0_4 = arith.constant 0 : index
    %3 = vector.load %arg3[%c0_3, %c0_4] : memref<1x128xf32, #tpu.memory_space<vmem>>, vector<1x128xf32>
    %4 = vector.broadcast %3 : vector<1x128xf32> to vector<16x128xf32>
    %5 = arith.addf %2, %4 : vector<16x128xf32>
    %cst_5 = arith.constant 0.000000e+00 : f32
    %6 = vector.broadcast %cst_5 : f32 to vector<16x128xf32>
    %7 = arith.maximumf %5, %6 : vector<16x128xf32>
    %8 = arith.truncf %7 : vector<16x128xf32> to vector<16x128xbf16>
    %c0_6 = arith.constant 0 : index
    %c0_7 = arith.constant 0 : index
    %9 = vector.load %arg4[%c0_6, %c0_7] : memref<128x256xbf16, #tpu.memory_space<vmem>>, vector<128x256xbf16>
    %cst_8 = arith.constant dense<0.000000e+00> : vector<16x256xf32>
    %10 = tpu.matmul %8, %9, %cst_8 {dimension_numbers = #tpu.dot_dimension_numbers<[1], [0], [0], [1], [0, 0, 1, 1], [], []>} : vector<16x128xbf16>, vector<128x256xbf16>, vector<16x256xf32> -> vector<16x256xf32>
    %c0_9 = arith.constant 0 : index
    %c0_10 = arith.constant 0 : index
    %11 = vector.load %arg5[%c0_9, %c0_10] : memref<1x256xf32, #tpu.memory_space<vmem>>, vector<1x256xf32>
    %12 = vector.broadcast %11 : vector<1x256xf32> to vector<16x256xf32>
    %13 = arith.addf %10, %12 : vector<16x256xf32>
    %14 = arith.truncf %13 : vector<16x256xf32> to vector<16x256xbf16>
    %c0_11 = arith.constant 0 : index
    %c0_12 = arith.constant 0 : index
    %15 = vector.load %arg10[%c0_11, %c0_12] : memref<16x256xbf16, #tpu.memory_space<vmem>>, vector<16x256xbf16>
    tpu.vector_store %arg10[%c0_11, %c0_12], %14 {strides = array<i32>} : memref<16x256xbf16, #tpu.memory_space<vmem>>, vector<16x256xbf16>,
    %c0_13 = arith.constant 0 : index
    %c0_14 = arith.constant 0 : index
    %16 = vector.load %arg6[%c0_13, %c0_14] : memref<128x128xbf16, #tpu.memory_space<vmem>>, vector<128x128xbf16>
    %cst_15 = arith.constant dense<0.000000e+00> : vector<16x128xf32>
    %17 = tpu.matmul %8, %16, %cst_15 {dimension_numbers = #tpu.dot_dimension_numbers<[1], [0], [0], [1], [0, 0, 1, 1], [], []>} : vector<16x128xbf16>, vector<128x128xbf16>, vector<16x128xf32> -> vector<16x128xf32>
    %c0_16 = arith.constant 0 : index
    %c0_17 = arith.constant 0 : index
    %18 = vector.load %arg7[%c0_16, %c0_17] : memref<1x128xf32, #tpu.memory_space<vmem>>, vector<1x128xf32>
    %19 = vector.broadcast %18 : vector<1x128xf32> to vector<16x128xf32>
    %20 = arith.addf %17, %19 : vector<16x128xf32>
    %cst_18 = arith.constant 0.000000e+00 : f32
    %21 = vector.broadcast %cst_18 : f32 to vector<16x128xf32>
    %22 = arith.maximumf %20, %21 : vector<16x128xf32>
    %23 = arith.truncf %22 : vector<16x128xf32> to vector<16x128xbf16>
    %c0_19 = arith.constant 0 : index
    %c0_20 = arith.constant 0 : index
    %24 = vector.load %arg8[%c0_19, %c0_20] : memref<128x32xbf16, #tpu.memory_space<vmem>>, vector<128x32xbf16>
    %cst_21 = arith.constant dense<0.000000e+00> : vector<16x32xf32>
    %25 = tpu.matmul %23, %24, %cst_21 {dimension_numbers = #tpu.dot_dimension_numbers<[1], [0], [0], [1], [0, 0, 1, 1], [], []>} : vector<16x128xbf16>, vector<128x32xbf16>, vector<16x32xf32> -> vector<16x32xf32>
    %c0_22 = arith.constant 0 : index
    %c0_23 = arith.constant 0 : index
    %26 = vector.load %arg9[%c0_22, %c0_23] : memref<1x32xf32, #tpu.memory_space<vmem>>, vector<1x32xf32>
    %27 = vector.broadcast %26 : vector<1x32xf32> to vector<16x32xf32>
    %28 = arith.addf %25, %27 : vector<16x32xf32>
    %cst_24 = arith.constant 0.000000e+00 : f32
    %29 = vector.broadcast %cst_24 : f32 to vector<16x32xf32>
    %30 = arith.maximumf %28, %29 : vector<16x32xf32>
    %c0_25 = arith.constant 0 : index
    %c0_26 = arith.constant 0 : index
    %31 = vector.load %arg11[%c0_25, %c0_26] : memref<16x32xf32, #tpu.memory_space<vmem>>, vector<16x32xf32>
    tpu.vector_store %arg11[%c0_25, %c0_26], %30 {strides = array<i32>} : memref<16x32xf32, #tpu.memory_space<vmem>>, vector<16x32xf32>,
    return
  }
  func.func @transform_0(%arg0: i32) -> (i32, i32) {
    %c0_i32 = arith.constant 0 : i32
    %c0_i32_0 = arith.constant 0 : i32
    return %arg0, %c0_i32 : i32, i32
  }
  func.func @transform_1(%arg0: i32) -> (i32, i32) {
    %c0_i32 = arith.constant 0 : i32
    %c0_i32_0 = arith.constant 0 : i32
    %c0_i32_1 = arith.constant 0 : i32
    return %c0_i32, %c0_i32_0 : i32, i32
  }
  func.func @transform_2(%arg0: i32) -> (i32, i32) {
    %c0_i32 = arith.constant 0 : i32
    %c0_i32_0 = arith.constant 0 : i32
    %c0_i32_1 = arith.constant 0 : i32
    return %c0_i32, %c0_i32_0 : i32, i32
  }
  func.func @transform_3(%arg0: i32) -> (i32, i32) {
    %c0_i32 = arith.constant 0 : i32
    %c0_i32_0 = arith.constant 0 : i32
    %c0_i32_1 = arith.constant 0 : i32
    return %c0_i32, %c0_i32_0 : i32, i32
  }
  func.func @transform_4(%arg0: i32) -> (i32, i32) {
    %c0_i32 = arith.constant 0 : i32
    %c0_i32_0 = arith.constant 0 : i32
    %c0_i32_1 = arith.constant 0 : i32
    return %c0_i32, %c0_i32_0 : i32, i32
  }
  func.func @transform_5(%arg0: i32) -> (i32, i32) {
    %c0_i32 = arith.constant 0 : i32
    %c0_i32_0 = arith.constant 0 : i32
    %c0_i32_1 = arith.constant 0 : i32
    return %c0_i32, %c0_i32_0 : i32, i32
  }
  func.func @transform_6(%arg0: i32) -> (i32, i32) {
    %c0_i32 = arith.constant 0 : i32
    %c0_i32_0 = arith.constant 0 : i32
    %c0_i32_1 = arith.constant 0 : i32
    return %c0_i32, %c0_i32_0 : i32, i32
  }
  func.func @transform_7(%arg0: i32) -> (i32, i32) {
    %c0_i32 = arith.constant 0 : i32
    %c0_i32_0 = arith.constant 0 : i32
    %c0_i32_1 = arith.constant 0 : i32
    return %c0_i32, %c0_i32_0 : i32, i32
  }
  func.func @transform_8(%arg0: i32) -> (i32, i32) {
    %c0_i32 = arith.constant 0 : i32
    %c0_i32_0 = arith.constant 0 : i32
    %c0_i32_1 = arith.constant 0 : i32
    return %c0_i32, %c0_i32_0 : i32, i32
  }
  func.func @transform_9(%arg0: i32) -> (i32, i32) {
    %c0_i32 = arith.constant 0 : i32
    %c0_i32_0 = arith.constant 0 : i32
    return %arg0, %c0_i32 : i32, i32
  }
  func.func @transform_10(%arg0: i32) -> (i32, i32) {
    %c0_i32 = arith.constant 0 : i32
    %c0_i32_0 = arith.constant 0 : i32
    return %arg0, %c0_i32 : i32, i32
  }
}

</mosaic_0001>

<llo_original>
// kernel: _zccbam_forward_padded.1
$region0: #{_zccbam_forward_padded.1}
  #allocation0 [shape = 'u32[]', space=smem, size = 0x4, offset = 0x4, fixed_abs, tag = 'smem constant byte address 0x4 - core index']
  #allocation1 [shape = 'u32[72,128]{1,0:T(1,128)}', space=vmem, size = 0x9000, scoped, tag = 'internal scratch']
  %s0 = inlined_call_operand.vmem [shape: bf16[12,40], index: 0, kind: input, shape index: {}]
  %s1 = inlined_call_operand.vmem [shape: bf16[40,128], index: 1, kind: input, shape index: {}]
  %s2 = inlined_call_operand.vmem [shape: f32[1,128], index: 2, kind: input, shape index: {}]
  %s3 = inlined_call_operand.vmem [shape: bf16[128,256], index: 3, kind: input, shape index: {}]
  %s4 = inlined_call_operand.vmem [shape: f32[1,256], index: 4, kind: input, shape index: {}]
  %s5 = inlined_call_operand.vmem [shape: bf16[128,128], index: 5, kind: input, shape index: {}]
  %s6 = inlined_call_operand.vmem [shape: f32[1,128], index: 6, kind: input, shape index: {}]
  %s7 = inlined_call_operand.vmem [shape: bf16[128,32], index: 7, kind: input, shape index: {}]
  %s8 = inlined_call_operand.vmem [shape: f32[1,32], index: 8, kind: input, shape index: {}]
  %s9 = inlined_call_operand.vmem [shape: bf16[12,256], index: 9, kind: output, shape index: {0}]
  %s10 = inlined_call_operand.hbm [shape: f32[12,32], index: 10, kind: output, shape index: {1}]
  %11 = xla_tuple %s9, %s10
  %s12 = sld [smem:[#allocation0]]
  $region54: #{_zccbam_forward_padded.1} parent=0
    _
  %s14 = ssub.s32 1, %s12
  %s15 = scalar_select 0, %s14, %s12
  $region1: #{_zccbam_forward_padded.1} parent=0
    #allocation2 [shape = 'u8[8192]{0}', space=vmem, size = 0x2000, scoped, tag = 'output window, operand 1, single buffered']
    #allocation3 [shape = 's32[1]{0}', space=sflag, size = 0x4, scoped, tag = 'scoped memory for _zccbam_forward_padded.1']
    %16 = vsyncpa [#allocation3], 0
    // Predicated region
    $region2: #{_zccbam_forward_padded.1} parent=1 // pred_check
      _
    $region3: #{_zccbam_forward_padded.1} parent=1 // pred_check_branch
      %18 = sbr.rel (0) target = $region5
    $region4: #{_zccbam_forward_padded.1} parent=1 // pred_region
      _
    $region5: #{_zccbam_forward_padded.1} parent=1 // pred_fallthru
      _
    // Predicated region
    $region6: #{_zccbam_forward_padded.1} parent=1 // pred_check
      _
    $region7: #{_zccbam_forward_padded.1} parent=1 // pred_check_branch
      %20 = sbr.rel (0) target = $region9
    $region8: #{_zccbam_forward_padded.1} parent=1 // pred_region
      _
    $region9: #{_zccbam_forward_padded.1} parent=1 // pred_fallthru
      _
    // Predicated region
    $region10: #{_zccbam_forward_padded.1} parent=1 // pred_check
      _
    $region11: #{_zccbam_forward_padded.1} parent=1 // pred_check_branch
      %22 = sbr.rel (0) target = $region13
    $region12: #{_zccbam_forward_padded.1} parent=1 // pred_region
      _
    $region13: #{_zccbam_forward_padded.1} parent=1 // pred_fallthru
      _
    // Predicated region
    $region14: #{_zccbam_forward_padded.1} parent=1 // pred_check
      _
    $region15: #{_zccbam_forward_padded.1} parent=1 // pred_check_branch
      %24 = sbr.rel (0) target = $region17
    $region16: #{_zccbam_forward_padded.1} parent=1 // pred_region
      _
    $region17: #{_zccbam_forward_padded.1} parent=1 // pred_fallthru
      _
    // Predicated region
    $region18: #{_zccbam_forward_padded.1} parent=1 // pred_check
      _
    $region19: #{_zccbam_forward_padded.1} parent=1 // pred_check_branch
      %26 = sbr.rel (0) target = $region21
    $region20: #{_zccbam_forward_padded.1} parent=1 // pred_region
      _
    $region21: #{_zccbam_forward_padded.1} parent=1 // pred_fallthru
      _
    // Predicated region
    $region22: #{_zccbam_forward_padded.1} parent=1 // pred_check
      _
    $region23: #{_zccbam_forward_padded.1} parent=1 // pred_check_branch
      %28 = sbr.rel (0) target = $region25
    $region24: #{_zccbam_forward_padded.1} parent=1 // pred_region
      _
    $region25: #{_zccbam_forward_padded.1} parent=1 // pred_fallthru
      _
    // Predicated region
    $region26: #{_zccbam_forward_padded.1} parent=1 // pred_check
      _
    $region27: #{_zccbam_forward_padded.1} parent=1 // pred_check_branch
      %30 = sbr.rel (0) target = $region29
    $region28: #{_zccbam_forward_padded.1} parent=1 // pred_region
      _
    $region29: #{_zccbam_forward_padded.1} parent=1 // pred_fallthru
      _
    // Predicated region
    $region30: #{_zccbam_forward_padded.1} parent=1 // pred_check
      _
    $region31: #{_zccbam_forward_padded.1} parent=1 // pred_check_branch
      %32 = sbr.rel (0) target = $region33
    $region32: #{_zccbam_forward_padded.1} parent=1 // pred_region
      _
    $region33: #{_zccbam_forward_padded.1} parent=1 // pred_fallthru
      _
    // Predicated region
    $region34: #{_zccbam_forward_padded.1} parent=1 // pred_check
      _
    $region35: #{_zccbam_forward_padded.1} parent=1 // pred_check_branch
      %34 = sbr.rel (0) target = $region37
    $region36: #{_zccbam_forward_padded.1} parent=1 // pred_region
      _
    $region37: #{_zccbam_forward_padded.1} parent=1 // pred_fallthru
      _
    %v36 = vld [vmem:[%s0] sm:$0xf]
    %v37 = vld [vmem:[%s0 + $0x4] sm:$0xf]
    %v38 = vld [vmem:[%s1] sm:$0xf]
    %v39 = vld [vmem:[%s1 + $0x4] sm:$0xf]
    %v40 = vld [vmem:[%s1 + $0x8] sm:$0xf]
    %v41 = vld [vmem:[%s1 + $0xc] sm:$0xf]
    %v42 = vld [vmem:[%s1 + $0x10] sm:$0xf]
    %v43 = vld [vmem:[%s2] sm:$0x1]
    %v45 = vperm.slane %v43, 0
    %v49 = vunpack.c.l.b16 %v36
    %v50 = vunpack.c.l.b16 %v37
    %v51 = vpack.c.b16 %v50, %v49
    %v57 = vunpack.c.l.b16 %v38
    %v58 = vunpack.c.l.b16 %v39
    %v59 = vunpack.c.l.b16 %v40
    %v60 = vunpack.c.l.b16 %v41
    %v61 = vunpack.c.l.b16 %v42
    %v62 = vpack.c.b16 %v58, %v57
    %v63 = vpack.c.b16 %v60, %v59
    %v64 = vpack.c.b16 %v61, %v61
    %vm67 = vcmask 326656
    %v69 = vsel %vm67, %v51, 0
    %vm71 = vcmask 1043456
    %v73 = vsel %vm71, %v64, 0
    %75 = vmatpush.bf16.msra.mxu0 0
    %76 = vmatpush.bf16.msra.mxu0 0
    %77 = vmatpush.bf16.msra.mxu0 0
    %78 = vmatpush.bf16.msra.mxu0 0
    %79 = vmatpush.bf16.msra.mxu0 0
    %80 = vmatpush.bf16.msra.mxu0 %v73
    %81 = vmatpush.bf16.msra.mxu0 %v63
    %82 = vmatpush.bf16.msra.mxu0 %v62
    %83 = vmatmul.bf16.gmra.mxu0 %v69
    %v84 = vpop.f32.mrf.mxu0
    %v85 = vadd.f32 %v45, %v84
    %v86 = vpop.f32.mrf.mxu0
    %v87 = vadd.f32 %v45, %v86
    %88 = vdwg.mxu0
    %v89 = vmax.f32 %v85, 0.0
    %v90 = vmax.f32 %v87, 0.0
    %v91 = vpack.c.bf16 %v90, %v89
    %v92 = vld [vmem:[%s3] sm:$0xff]
    %v93 = vld [vmem:[%s3 + $0x8] sm:$0xff]
    %v94 = vld [vmem:[%s3 + $0x10] sm:$0xff]
    %v95 = vld [vmem:[%s3 + $0x18] sm:$0xff]
    %v96 = vld [vmem:[%s3 + $0x20] sm:$0xff]
    %v97 = vld [vmem:[%s3 + $0x28] sm:$0xff]
    %v98 = vld [vmem:[%s3 + $0x30] sm:$0xff]
    %v99 = vld [vmem:[%s3 + $0x38] sm:$0xff]
    %v100 = vld [vmem:[%s3 + $0x40] sm:$0xff]
    %v101 = vld [vmem:[%s3 + $0x48] sm:$0xff]
    %v102 = vld [vmem:[%s3 + $0x50] sm:$0xff]
    %v103 = vld [vmem:[%s3 + $0x58] sm:$0xff]
    %v104 = vld [vmem:[%s3 + $0x60] sm:$0xff]
    %v105 = vld [vmem:[%s3 + $0x68] sm:$0xff]
    %v106 = vld [vmem:[%s3 + $0x70] sm:$0xff]
    %v107 = vld [vmem:[%s3 + $0x78] sm:$0xff]
    %v108 = vld [vmem:[%s4] sm:$0x3]
    %v110 = vperm.slane %v108, 0
    %v111 = vperm.slane %v108, 1
    %v130 = vunpack.c.l.b16 %v92
    %v131 = vunpack.c.h.b16 %v92
    %v132 = vunpack.c.l.b16 %v93
    %v133 = vunpack.c.h.b16 %v93
    %v134 = vunpack.c.l.b16 %v94
    %v135 = vunpack.c.h.b16 %v94
    %v136 = vunpack.c.l.b16 %v95
    %v137 = vunpack.c.h.b16 %v95
    %v138 = vunpack.c.l.b16 %v96
    %v139 = vunpack.c.h.b16 %v96
    %v140 = vunpack.c.l.b16 %v97
    %v141 = vunpack.c.h.b16 %v97
    %v142 = vunpack.c.l.b16 %v98
    %v143 = vunpack.c.h.b16 %v98
    %v144 = vunpack.c.l.b16 %v99
    %v145 = vunpack.c.h.b16 %v99
    %v146 = vunpack.c.l.b16 %v100
    %v147 = vunpack.c.h.b16 %v100
    %v148 = vunpack.c.l.b16 %v101
    %v149 = vunpack.c.h.b16 %v101
    %v150 = vunpack.c.l.b16 %v102
    %v151 = vunpack.c.h.b16 %v102
    %v152 = vunpack.c.l.b16 %v103
    %v153 = vunpack.c.h.b16 %v103
    %v154 = vunpack.c.l.b16 %v104
    %v155 = vunpack.c.h.b16 %v104
    %v156 = vunpack.c.l.b16 %v105
    %v157 = vunpack.c.h.b16 %v105
    %v158 = vunpack.c.l.b16 %v106
    %v159 = vunpack.c.h.b16 %v106
    %v160 = vunpack.c.l.b16 %v107
    %v161 = vunpack.c.h.b16 %v107
    %v162 = vpack.c.b16 %v132, %v130
    %v163 = vpack.c.b16 %v133, %v131
    %v164 = vpack.c.b16 %v136, %v134
    %v165 = vpack.c.b16 %v137, %v135
    %v166 = vpack.c.b16 %v140, %v138
    %v167 = vpack.c.b16 %v141, %v139
    %v168 = vpack.c.b16 %v144, %v142
    %v169 = vpack.c.b16 %v145, %v143
    %v170 = vpack.c.b16 %v148, %v146
    %v171 = vpack.c.b16 %v149, %v147
    %v172 = vpack.c.b16 %v152, %v150
    %v173 = vpack.c.b16 %v153, %v151
    %v174 = vpack.c.b16 %v156, %v154
    %v175 = vpack.c.b16 %v157, %v155
    %v176 = vpack.c.b16 %v160, %v158
    %v177 = vpack.c.b16 %v161, %v159
    %194 = vmatpush.bf16.msra.mxu0 %v176
    %195 = vmatpush.bf16.msra.mxu0 %v174
    %196 = vmatpush.bf16.msra.mxu0 %v172
    %197 = vmatpush.bf16.msra.mxu0 %v170
    %198 = vmatpush.bf16.msra.mxu0 %v168
    %199 = vmatpush.bf16.msra.mxu0 %v166
    %200 = vmatpush.bf16.msra.mxu0 %v164
    %201 = vmatpush.bf16.msra.mxu0 %v162
    %202 = vmatmul.bf16.gmra.mxu0 %v91
    %v203 = vpop.f32.mrf.mxu0
    %v204 = vadd.f32 %v110, %v203
    %v205 = vpop.f32.mrf.mxu0
    %v206 = vadd.f32 %v110, %v205
    %207 = vdwg.mxu0
    %208 = vmatpush.bf16.msra.mxu0 %v177
    %209 = vmatpush.bf16.msra.mxu0 %v175
    %210 = vmatpush.bf16.msra.mxu0 %v173
    %211 = vmatpush.bf16.msra.mxu0 %v171
    %212 = vmatpush.bf16.msra.mxu0 %v169
    %213 = vmatpush.bf16.msra.mxu0 %v167
    %214 = vmatpush.bf16.msra.mxu0 %v165
    %215 = vmatpush.bf16.msra.mxu0 %v163
    %216 = vmatmul.bf16.gmra.mxu0 %v91
    %v217 = vpop.f32.mrf.mxu0
    %v218 = vadd.f32 %v111, %v217
    %v219 = vpop.f32.mrf.mxu0
    %v220 = vadd.f32 %v111, %v219
    %221 = vdwg.mxu0
    %v222 = vpack.c.bf16 %v218, %v204
    %v223 = vpack.c.bf16 %v220, %v206
    %224 = vst [vmem:[%s9] sm:$0xff] %v222
    %225 = vst [vmem:[%s9 + $0x8] sm:$0xff] %v223
    %v226 = vld [vmem:[%s5] sm:$0xf]
    %v227 = vld [vmem:[%s5 + $0x4] sm:$0xf]
    %v228 = vld [vmem:[%s5 + $0x8] sm:$0xf]
    %v229 = vld [vmem:[%s5 + $0xc] sm:$0xf]
    %v230 = vld [vmem:[%s5 + $0x10] sm:$0xf]
    %v231 = vld [vmem:[%s5 + $0x14] sm:$0xf]
    %v232 = vld [vmem:[%s5 + $0x18] sm:$0xf]
    %v233 = vld [vmem:[%s5 + $0x1c] sm:$0xf]
    %v234 = vld [vmem:[%s5 + $0x20] sm:$0xf]
    %v235 = vld [vmem:[%s5 + $0x24] sm:$0xf]
    %v236 = vld [vmem:[%s5 + $0x28] sm:$0xf]
    %v237 = vld [vmem:[%s5 + $0x2c] sm:$0xf]
    %v238 = vld [vmem:[%s5 + $0x30] sm:$0xf]
    %v239 = vld [vmem:[%s5 + $0x34] sm:$0xf]
    %v240 = vld [vmem:[%s5 + $0x38] sm:$0xf]
    %v241 = vld [vmem:[%s5 + $0x3c] sm:$0xf]
    %v242 = vld [vmem:[%s6] sm:$0x1]
    %v244 = vperm.slane %v242, 0
    %v262 = vunpack.c.l.b16 %v226
    %v263 = vunpack.c.l.b16 %v227
    %v264 = vunpack.c.l.b16 %v228
    %v265 = vunpack.c.l.b16 %v229
    %v266 = vunpack.c.l.b16 %v230
    %v267 = vunpack.c.l.b16 %v231
    %v268 = vunpack.c.l.b16 %v232
    %v269 = vunpack.c.l.b16 %v233
    %v270 = vunpack.c.l.b16 %v234
    %v271 = vunpack.c.l.b16 %v235
    %v272 = vunpack.c.l.b16 %v236
    %v273 = vunpack.c.l.b16 %v237
    %v274 = vunpack.c.l.b16 %v238
    %v275 = vunpack.c.l.b16 %v239
    %v276 = vunpack.c.l.b16 %v240
    %v277 = vunpack.c.l.b16 %v241
    %v278 = vpack.c.b16 %v263, %v262
    %v279 = vpack.c.b16 %v265, %v264
    %v280 = vpack.c.b16 %v267, %v266
    %v281 = vpack.c.b16 %v269, %v268
    %v282 = vpack.c.b16 %v271, %v270
    %v283 = vpack.c.b16 %v273, %v272
    %v284 = vpack.c.b16 %v275, %v274
    %v285 = vpack.c.b16 %v277, %v276
    %294 = vmatpush.bf16.msra.mxu0 %v285
    %295 = vmatpush.bf16.msra.mxu0 %v284
    %296 = vmatpush.bf16.msra.mxu0 %v283
    %297 = vmatpush.bf16.msra.mxu0 %v282
    %298 = vmatpush.bf16.msra.mxu0 %v281
    %299 = vmatpush.bf16.msra.mxu0 %v280
    %300 = vmatpush.bf16.msra.mxu0 %v279
    %301 = vmatpush.bf16.msra.mxu0 %v278
    %302 = vmatmul.bf16.gmra.mxu0 %v91
    %v303 = vpop.f32.mrf.mxu0
    %v304 = vadd.f32 %v244, %v303
    %v305 = vpop.f32.mrf.mxu0
    %v306 = vadd.f32 %v244, %v305
    %307 = vdwg.mxu0
    %v308 = vmax.f32 %v304, 0.0
    %v309 = vmax.f32 %v306, 0.0
    %v310 = vpack.c.bf16 %v309, %v308
    %v311 = vld [vmem:[%s7] sm:$0xf]
    %v312 = vld [vmem:[%s7 + $0x4] sm:$0xf]
    %v313 = vld [vmem:[%s7 + $0x8] sm:$0xf]
    %v314 = vld [vmem:[%s7 + $0xc] sm:$0xf]
    %v315 = vld [vmem:[%s7 + $0x10] sm:$0xf]
    %v316 = vld [vmem:[%s7 + $0x14] sm:$0xf]
    %v317 = vld [vmem:[%s7 + $0x18] sm:$0xf]
    %v318 = vld [vmem:[%s7 + $0x1c] sm:$0xf]
    %v319 = vld [vmem:[%s7 + $0x20] sm:$0xf]
    %v320 = vld [vmem:[%s7 + $0x24] sm:$0xf]
    %v321 = vld [vmem:[%s7 + $0x28] sm:$0xf]
    %v322 = vld [vmem:[%s7 + $0x2c] sm:$0xf]
    %v323 = vld [vmem:[%s7 + $0x30] sm:$0xf]
    %v324 = vld [vmem:[%s7 + $0x34] sm:$0xf]
    %v325 = vld [vmem:[%s7 + $0x38] sm:$0xf]
    %v326 = vld [vmem:[%s7 + $0x3c] sm:$0xf]
    %v327 = vld [vmem:[%s8] sm:$0x1]
    %v329 = vperm.slane %v327, 0
    %v347 = vunpack.c.l.b16 %v311
    %v348 = vunpack.c.l.b16 %v312
    %v349 = vunpack.c.l.b16 %v313
    %v350 = vunpack.c.l.b16 %v314
    %v351 = vunpack.c.l.b16 %v315
    %v352 = vunpack.c.l.b16 %v316
    %v353 = vunpack.c.l.b16 %v317
    %v354 = vunpack.c.l.b16 %v318
    %v355 = vunpack.c.l.b16 %v319
    %v356 = vunpack.c.l.b16 %v320
    %v357 = vunpack.c.l.b16 %v321
    %v358 = vunpack.c.l.b16 %v322
    %v359 = vunpack.c.l.b16 %v323
    %v360 = vunpack.c.l.b16 %v324
    %v361 = vunpack.c.l.b16 %v325
    %v362 = vunpack.c.l.b16 %v326
    %v363 = vpack.c.b16 %v348, %v347
    %v364 = vpack.c.b16 %v350, %v349
    %v365 = vpack.c.b16 %v352, %v351
    %v366 = vpack.c.b16 %v354, %v353
    %v367 = vpack.c.b16 %v356, %v355
    %v368 = vpack.c.b16 %v358, %v357
    %v369 = vpack.c.b16 %v360, %v359
    %v370 = vpack.c.b16 %v362, %v361
    %379 = vmatpush.bf16.msra.mxu0 %v370
    %380 = vmatpush.bf16.msra.mxu0 %v369
    %381 = vmatpush.bf16.msra.mxu0 %v368
    %382 = vmatpush.bf16.msra.mxu0 %v367
    %383 = vmatpush.bf16.msra.mxu0 %v366
    %384 = vmatpush.bf16.msra.mxu0 %v365
    %385 = vmatpush.bf16.msra.mxu0 %v364
    %386 = vmatpush.bf16.msra.mxu0 %v363
    %387 = vmatmul.bf16.gmra.mxu0 %v310
    %v388 = vpop.f32.mrf.mxu0
    %v389 = vadd.f32 %v329, %v388
    %v390 = vpop.f32.mrf.mxu0
    %v391 = vadd.f32 %v329, %v390
    %392 = vdwg.mxu0
    %v393 = vmax.f32 %v389, 0.0
    %v394 = vmax.f32 %v391, 0.0
    %vm395 = vcmask 261120
    %396 = vst.msk [vmem:[#allocation2] sm:$0xff] %vm395, %v393
    %397 = vst.msk [vmem:[#allocation2 + $0x8] sm:$0xff] %vm395, %v394
    // Predicated region
    $region38: #{_zccbam_forward_padded.1} parent=1 // pred_check
      _
    $region39: #{_zccbam_forward_padded.1} parent=1 // pred_check_branch
      %399 = sbr.rel (0) target = $region41
    $region40: #{_zccbam_forward_padded.1} parent=1 // pred_region
      _
    $region41: #{_zccbam_forward_padded.1} parent=1 // pred_fallthru
      _
    // Predicated region
    $region42: #{_zccbam_forward_padded.1} parent=1 // pred_check
      _
    $region43: #{_zccbam_forward_padded.1} parent=1 // pred_check_branch
      %401 = sbr.rel (0) target = $region45
    $region44: #{_zccbam_forward_padded.1} parent=1 // pred_region
      %403 = vsyncadd [#allocation3], 0
      %s404 = sshll.u32 [#allocation2], 4
      %s405 = int_to_ptr.vmem [resolvable:$true] %s404
      %s406 = sshll.u32 %s10, 4
      %s407 = int_to_ptr.hbm [resolvable:$true] %s406
      %412 = dma.vmem_to_hbm [thread:$0]  %s405, 256, %s407, [#allocation3], 128, 128, 8
    $region45: #{_zccbam_forward_padded.1} parent=1 // pred_fallthru
      _
    // Predicated region
    $region46: #{_zccbam_forward_padded.1} parent=1 // pred_check
      _
    $region47: #{_zccbam_forward_padded.1} parent=1 // pred_check_branch
      %414 = sbr.rel (0) target = $region49
    $region48: #{_zccbam_forward_padded.1} parent=1 // pred_region
      _
    $region49: #{_zccbam_forward_padded.1} parent=1 // pred_fallthru
      _
    // Predicated region
    $region50: #{_zccbam_forward_padded.1} parent=1 // pred_check
      _
    $region51: #{_zccbam_forward_padded.1} parent=1 // pred_check_branch
      %416 = sbr.rel (0) target = $region53
    $region52: #{_zccbam_forward_padded.1} parent=1 // pred_region
      %418 = dma.done [#allocation3], 256
    $region53: #{_zccbam_forward_padded.1} parent=1 // pred_fallthru
      _
    %419 = vsyncpa [#allocation3], 1

</llo_original>
